<compile_context>
chip_gen: v5e
topology: v5e:2x2
jax: 0.10.0
libtpu: 0.0.40
codegen_flags: <defaults>
</compile_context>

<pallas_src>
import jax
import jax.numpy as jnp
from jax.experimental import pallas as pl
from jax.experimental.pallas import tpu as pltpu

# Quantization parameters (deterministic; module __init__ args of the test)
IN_SCALE = 1.0          # quantize_per_tensor(x, 1.0, 0, quint8)
IN_ZP = 0
OUT_SCALE = 0.6
OUT_ZP = 1
INV_OUT_SCALE = 1.0 / OUT_SCALE   # constant multiply instead of f32 divide
# dtype = torch.quint8 -> qmin=0, qmax=255
QMIN = 0.0
QMAX = 255.0


def _quant_cat_kernel(x_ref, o_ref):
    # x_ref: (N, tm)    float32 tile of the flattened (N, C*H*W) input
    # o_ref: (N, 3, tm) float32 tile of the flattened (N, 3, C*H*W) output
    x = x_ref[...]
    # quantize_per_tensor(x, 1.0, 0, quint8) followed by dequantize:
    # round-half-even + clamp to [0, 255] (scale=1, zp=0 fold away)
    q1 = jnp.clip(jnp.round(x), QMIN, QMAX)
    # requantize with the cat's output scale / zero_point, then final dequantize
    q2 = jnp.clip(jnp.round(q1 * INV_OUT_SCALE) + OUT_ZP, QMIN, QMAX)
    y = ((q2 - OUT_ZP) * OUT_SCALE).astype(o_ref.dtype)
    # 3-way channel concat of identical tensors: compute once, store 3 copies
    o_ref[...] = jnp.broadcast_to(y[:, None, :], o_ref.shape)


def _pick_tile(M, N, max_tile_bytes):
    """Largest multiple-of-128 divisor of M whose (N, t) f32 tile fits the budget."""
    if M % 128 != 0:
        return M  # fall back to a single full-extent block (still legal)
    budget = max(128, (max_tile_bytes // (4 * N)) // 128 * 128)
    t = min(M, budget)
    while t >= 128:
        if M % t == 0:
            return t
        t -= 128
    return M


def loop_append_quantized_cat(x, *, max_tile_bytes=2 * 1024 * 1024):
    """x: float32 [N, C, H, W]  ->  float32 [N, 3*C, H, W] (NCHW channel concat)."""
    N, C, H, W = x.shape
    M = C * H * W
    x2 = x.reshape(N, M)                 # free, lane-dense view of the input
    tm = _pick_tile(M, N, max_tile_bytes)
    grid = (M // tm,)

    numel = N * M
    cost = pl.CostEstimate(
        flops=8 * numel,
        transcendentals=0,
        bytes_accessed=4 * numel + 3 * 4 * numel,   # read once, write 3x
    )

    out3 = pl.pallas_call(
        _quant_cat_kernel,
        out_shape=jax.ShapeDtypeStruct((N, 3, M), x.dtype),
        grid_spec=pltpu.PrefetchScalarGridSpec(
            num_scalar_prefetch=0,
            grid=grid,
            in_specs=[pl.BlockSpec((N, tm), lambda i: (0, i))],
            out_specs=pl.BlockSpec((N, 3, tm), lambda i: (0, 0, i)),
        ),
        compiler_params=pltpu.CompilerParams(
            # Tiles are independent -> "parallel" lets v7x shard the axis across
            # its 2 TensorCores; harmless on single-TC v5e/v6e.
            dimension_semantics=("parallel",),
        ),
        cost_estimate=cost,
    )(x2)

    # (N, 3, C*H*W) is bit-identical in memory to (N, 3C, H, W): free reshape
    return out3.reshape(N, 3 * C, H, W)


def _reference(x):
    # Pure-JAX reference with the same op ordering / constants as the kernel.
    q1 = jnp.clip(jnp.round(x / IN_SCALE) + IN_ZP, QMIN, QMAX)
    v = (q1 - IN_ZP) * IN_SCALE
    v = jnp.concatenate([v, v, v], axis=1)
    q2 = jnp.clip(jnp.round(v * INV_OUT_SCALE) + OUT_ZP, QMIN, QMAX)
    return (q2 - OUT_ZP) * OUT_SCALE


if __name__ == "__main__":
    key = jax.random.PRNGKey(0)
    # small NCHW shape consistent with the module's input
    x = jax.random.uniform(key, (2, 4, 16, 16), dtype=jnp.float32) * 255.0

    out = jax.block_until_ready(loop_append_quantized_cat(x))
    ref = _reference(x)

    assert out.shape == (2, 12, 16, 16), out.shape
    assert jnp.allclose(out, ref, atol=1e-5), "mismatch vs reference"

    print("KERNEL_OK")
</pallas_src>

<mosaic_0001>
module attributes {stable_mosaic.version = 11 : i64} {
  func.func @_quant_cat_kernel(%arg0: i32, %arg1: memref<2x1024xf32, #tpu.memory_space<vmem>>, %arg2: memref<2x3x1024xf32, #tpu.memory_space<vmem>>) attributes {dimension_semantics = [#tpu.dimension_semantics<parallel>], iteration_bounds = array<i64: 1>, scalar_prefetch = 0 : i64, scratch_operands = 0 : i64, tpu.core_type = #tpu.core_type<tc>, window_params = [{transform_indices = @transform_0, window_bounds = array<i64: 2, 1024>}, {transform_indices = @transform_1, window_bounds = array<i64: 2, 3, 1024>}]} {
    %c0 = arith.constant 0 : index
    %c0_0 = arith.constant 0 : index
    %0 = vector.load %arg1[%c0, %c0_0] : memref<2x1024xf32, #tpu.memory_space<vmem>>, vector<2x1024xf32>
    %1 = math.roundeven %0 : vector<2x1024xf32>
    %cst = arith.constant 0.000000e+00 : f32
    %cst_1 = arith.constant 2.550000e+02 : f32
    %2 = vector.broadcast %cst : f32 to vector<2x1024xf32>
    %3 = arith.maximumf %2, %1 : vector<2x1024xf32>
    %4 = vector.broadcast %cst_1 : f32 to vector<2x1024xf32>
    %5 = arith.minimumf %4, %3 : vector<2x1024xf32>
    %cst_2 = arith.constant 1.66666663 : f32
    %6 = vector.broadcast %cst_2 : f32 to vector<2x1024xf32>
    %7 = arith.mulf %5, %6 : vector<2x1024xf32>
    %8 = math.roundeven %7 : vector<2x1024xf32>
    %cst_3 = arith.constant 1.000000e+00 : f32
    %9 = vector.broadcast %cst_3 : f32 to vector<2x1024xf32>
    %10 = arith.addf %8, %9 : vector<2x1024xf32>
    %cst_4 = arith.constant 0.000000e+00 : f32
    %cst_5 = arith.constant 2.550000e+02 : f32
    %11 = vector.broadcast %cst_4 : f32 to vector<2x1024xf32>
    %12 = arith.maximumf %11, %10 : vector<2x1024xf32>
    %13 = vector.broadcast %cst_5 : f32 to vector<2x1024xf32>
    %14 = arith.minimumf %13, %12 : vector<2x1024xf32>
    %cst_6 = arith.constant 1.000000e+00 : f32
    %15 = vector.broadcast %cst_6 : f32 to vector<2x1024xf32>
    %16 = arith.subf %14, %15 : vector<2x1024xf32>
    %cst_7 = arith.constant 6.000000e-01 : f32
    %17 = vector.broadcast %cst_7 : f32 to vector<2x1024xf32>
    %18 = arith.mulf %16, %17 : vector<2x1024xf32>
    %19 = vector.shape_cast %18 : vector<2x1024xf32> to vector<2x1x1024xf32>
    %20 = vector.shape_cast %19 : vector<2x1x1024xf32> to vector<2x1x1024xf32>
    %21 = vector.broadcast %20 : vector<2x1x1024xf32> to vector<2x3x1024xf32>
    %c0_8 = arith.constant 0 : index
    %c0_9 = arith.constant 0 : index
    %c0_10 = arith.constant 0 : index
    %22 = vector.load %arg2[%c0_8, %c0_9, %c0_10] : memref<2x3x1024xf32, #tpu.memory_space<vmem>>, vector<2x3x1024xf32>
    tpu.vector_store %arg2[%c0_8, %c0_9, %c0_10], %21 {strides = array<i32>} : memref<2x3x1024xf32, #tpu.memory_space<vmem>>, vector<2x3x1024xf32>,
    return
  }
  func.func @transform_0(%arg0: i32) -> (i32, i32) {
    %c0_i32 = arith.constant 0 : i32
    %c0_i32_0 = arith.constant 0 : i32
    return %c0_i32, %arg0 : i32, i32
  }
  func.func @transform_1(%arg0: i32) -> (i32, i32, i32) {
    %c0_i32 = arith.constant 0 : i32
    %c0_i32_0 = arith.constant 0 : i32
    %c0_i32_1 = arith.constant 0 : i32
    return %c0_i32, %c0_i32_0, %arg0 : i32, i32, i32
  }
}

</mosaic_0001>

<llo_original>
// kernel: tpu_custom_call.1
$region0: #{tpu_custom_call.1}
  #allocation0 [shape = 'u32[]', space=smem, size = 0x4, offset = 0x4, fixed_abs, tag = 'smem constant byte address 0x4 - core index']
  #allocation1 [shape = 'u32[72,128]{1,0:T(1,128)}', space=vmem, size = 0x9000, scoped, tag = 'internal scratch']
  %s0 = inlined_call_operand.hbm [shape: f32[2,1024], index: 0, kind: input, shape index: {}]
  %s1 = inlined_call_operand.vmem [shape: f32[2,3,1024], index: 1, kind: output, shape index: {}]
  %s2 = sld [smem:[#allocation0]]
  $region18: #{tpu_custom_call.1} parent=0
    _
  %s4 = ssub.s32 1, %s2
  %s5 = scalar_select 0, %s4, %s2
  $region1: #{tpu_custom_call.1} parent=0
    #allocation2 [shape = 'u8[8192]{0}', space=vmem, size = 0x2000, scoped, tag = 'input window, operand 0, single buffered']
    #allocation3 [shape = 's32[1]{0}', space=sflag, size = 0x4, scoped, tag = 'scoped memory for tpu_custom_call.1']
    %6 = vsyncpa [#allocation3], 0
    // Predicated region
    $region2: #{tpu_custom_call.1} parent=1 // pred_check
      _
    $region3: #{tpu_custom_call.1} parent=1 // pred_check_branch
      %8 = sbr.rel (0) target = $region5
    $region4: #{tpu_custom_call.1} parent=1 // pred_region
      %10 = vsyncadd [#allocation3], 0
      %s12 = sshll.u32 %s0, 4
      %s13 = int_to_ptr.hbm [resolvable:$true] %s12
      %s14 = sshll.u32 [#allocation2], 4
      %s15 = int_to_ptr.vmem [resolvable:$true] %s14
      %17 = dma.hbm_to_vmem [thread:$0]  %s13, 256, %s15, [#allocation3]
    $region5: #{tpu_custom_call.1} parent=1 // pred_fallthru
      _
    // Predicated region
    $region6: #{tpu_custom_call.1} parent=1 // pred_check
      _
    $region7: #{tpu_custom_call.1} parent=1 // pred_check_branch
      %19 = sbr.rel (0) target = $region9
    $region8: #{tpu_custom_call.1} parent=1 // pred_region
      %21 = dma.done [#allocation3], 256
    $region9: #{tpu_custom_call.1} parent=1 // pred_fallthru
      _
    %v22 = vld [vmem:[#allocation2] sm:$0xff]
    %v23 = vld [vmem:[#allocation2 + $0x8] sm:$0xff]
    %v24 = vround.ne.pseudo %v22
    %v25 = vround.ne.pseudo %v23
    %v26 = vmax.f32 %v24, 0.0
    %v27 = vmax.f32 %v25, 0.0
    %v28 = vmin.f32 %v26, 255.0
    %v29 = vmin.f32 %v27, 255.0
    %v30 = vmul.f32 %v28, 1.6666666
    %v31 = vmul.f32 %v29, 1.6666666
    %v32 = vround.ne.pseudo %v30
    %v33 = vround.ne.pseudo %v31
    %v34 = vadd.f32 %v32, 1.0
    %v35 = vadd.f32 %v33, 1.0
    %v36 = vmax.f32 %v34, 0.0
    %v37 = vmax.f32 %v35, 0.0
    %v38 = vmin.f32 %v36, 255.0
    %v39 = vmin.f32 %v37, 255.0
    %v40 = vsub.f32 %v38, 1.0
    %v41 = vsub.f32 %v39, 1.0
    %v42 = vmul.f32 %v40, 0.6
    %v43 = vmul.f32 %v41, 0.6
    %v46 = vrot.slane %v42, 1
    %v47 = vrot.slane %v42, 2
    %v48 = vrot.slane %v42, 3
    %v49 = vrot.slane %v43, 4
    %v50 = vrot.slane %v43, 5
    %v51 = vrot.slane %v43, 6
    %v52 = vrot.slane %v43, 7
    %vm53 = vcmask 1040384
    %v54 = vsel %vm53, %v42, %v46
    %vm55 = vcmask 1042434
    %v56 = vsel %vm55, %v47, %v48
    %vm57 = vcmask 1041408
    %v58 = vsel %vm57, %v54, %v56
    %vm59 = vcmask 1044484
    %v60 = vsel %vm59, %v49, %v50
    %vm61 = vcmask 1046534
    %v62 = vsel %vm61, %v51, %v52
    %vm63 = vcmask 1045508
    %v64 = vsel %vm63, %v60, %v62
    %vm65 = vcmask 1043456
    %v66 = vsel %vm65, %v58, %v64
    %vm67 = vcmask 1041409
    %v68 = vsel %vm67, %v42, %v46
    %vm69 = vcmask 1043459
    %v70 = vsel %vm69, %v47, %v48
    %vm71 = vcmask 1042433
    %v72 = vsel %vm71, %v68, %v70
    %vm73 = vcmask 1045509
    %v74 = vsel %vm73, %v49, %v50
    %vm75 = vcmask 1046528
    %v76 = vsel %vm75, %v52, %v51
    %vm77 = vcmask 1046533
    %v78 = vsel %vm77, %v74, %v76
    %vm79 = vcmask 1044481
    %v80 = vsel %vm79, %v72, %v78
    %v81 = vrot.slane %v80, 1
    %v82 = vperm.slane %v66, 0
    %v83 = vperm.slane %v66, 1
    %v84 = vperm.slane %v66, 2
    %v85 = vperm.slane %v66, 3
    %v86 = vperm.slane %v66, 4
    %v87 = vperm.slane %v66, 5
    %v88 = vperm.slane %v66, 6
    %v89 = vperm.slane %v66, 7
    %v90 = vperm.slane %v81, 0
    %v91 = vperm.slane %v81, 1
    %v92 = vperm.slane %v81, 2
    %v93 = vperm.slane %v81, 3
    %v94 = vperm.slane %v81, 4
    %v95 = vperm.slane %v81, 5
    %v96 = vperm.slane %v81, 6
    %v97 = vperm.slane %v81, 7
    %v98 = vrot.slane %v83, 4
    %v99 = vrot.slane %v85, 4
    %v100 = vrot.slane %v87, 4
    %v101 = vrot.slane %v89, 4
    %v102 = vrot.slane %v91, 4
    %v103 = vrot.slane %v93, 4
    %v104 = vrot.slane %v95, 4
    %v105 = vrot.slane %v97, 4
    %v106 = vsel %vm65, %v82, %v98
    %v107 = vsel %vm65, %v84, %v99
    %v108 = vsel %vm65, %v86, %v100
    %v109 = vsel %vm65, %v88, %v101
    %v110 = vsel %vm65, %v90, %v102
    %v111 = vsel %vm65, %v92, %v103
    %v112 = vsel %vm65, %v94, %v104
    %v113 = vsel %vm65, %v96, %v105
    %122 = vst [vmem:[%s1] sm:$0x77] %v106
    %123 = vst [vmem:[%s1 + $0x8] sm:$0x77] %v107
    %124 = vst [vmem:[%s1 + $0x10] sm:$0x77] %v108
    %125 = vst [vmem:[%s1 + $0x18] sm:$0x77] %v109
    %126 = vst [vmem:[%s1 + $0x20] sm:$0x77] %v110
    %127 = vst [vmem:[%s1 + $0x28] sm:$0x77] %v111
    %128 = vst [vmem:[%s1 + $0x30] sm:$0x77] %v112
    %129 = vst [vmem:[%s1 + $0x38] sm:$0x77] %v113
    // Predicated region
    $region10: #{tpu_custom_call.1} parent=1 // pred_check
      _
    $region11: #{tpu_custom_call.1} parent=1 // pred_check_branch
      %131 = sbr.rel (0) target = $region13
    $region12: #{tpu_custom_call.1} parent=1 // pred_region
      _
    $region13: #{tpu_custom_call.1} parent=1 // pred_fallthru
      _
    // Predicated region
    $region14: #{tpu_custom_call.1} parent=1 // pred_check
      _
    $region15: #{tpu_custom_call.1} parent=1 // pred_check_branch
      %133 = sbr.rel (0) target = $region17
    $region16: #{tpu_custom_call.1} parent=1 // pred_region
      _
    $region17: #{tpu_custom_call.1} parent=1 // pred_fallthru
      _
    %134 = vsyncpa [#allocation3], 1

</llo_original>
